<compile_context>
chip_gen: v6e
topology: v6e:2x2x1
jax: 0.10.0
libtpu: 0.0.40
codegen_flags: <defaults>
</compile_context>

<pallas_src>
import functools

import jax
import jax.numpy as jnp
from jax.experimental import pallas as pl
from jax.experimental.pallas import tpu as pltpu

EPS = 1e-5


def _bn_relu_folded(h, gamma, beta, inv_b):
    """Training-mode BatchNorm1d + ReLU with folded affine and single-pass stats.

    h: (B, N) f32. gamma/beta: (1, N) f32. inv_b = 1/B (static Python float).
    """
    mean = jnp.sum(h, axis=0, keepdims=True) * inv_b            # (1, N)
    mean_sq = jnp.sum(h * h, axis=0, keepdims=True) * inv_b     # (1, N)
    var = jnp.maximum(mean_sq - mean * mean, 0.0)               # biased var, clamped
    scale = jax.lax.rsqrt(var + EPS) * gamma                    # tiny (1, N) math
    shift = beta - mean * scale
    return jnp.maximum(h * scale + shift, 0.0)                  # 2 VPU ops / element


def _pred_mlp_kernel(
    x_ref,
    w1_ref, g1_ref, be1_ref,
    w2_ref, g2_ref, be2_ref,
    w3_ref, g3_ref, be3_ref,
    w4_ref, b4_ref,
    o_ref,
    h3_ref,                      # VMEM scratch (B, 16), persists across grid steps
    *, inv_b, compute_dtype,
):
    # ---- Layers 1-3: run once, full batch resident so BN statistics are exact.
    # Linear biases b1/b2/b3 intentionally omitted (cancelled by per-batch BN mean).
    @pl.when(pl.program_id(0) == 0)
    def _head():
        x = x_ref[...].astype(compute_dtype)
        h = jnp.dot(x, w1_ref[...], preferred_element_type=jnp.float32)
        h = _bn_relu_folded(h, g1_ref[...], be1_ref[...], inv_b)
        h = jnp.dot(h.astype(compute_dtype), w2_ref[...],
                    preferred_element_type=jnp.float32)
        h = _bn_relu_folded(h, g2_ref[...], be2_ref[...], inv_b)
        h = jnp.dot(h.astype(compute_dtype), w3_ref[...],
                    preferred_element_type=jnp.float32)
        h = _bn_relu_folded(h, g3_ref[...], be3_ref[...], inv_b)
        h3_ref[...] = h.astype(h3_ref.dtype)

    # ---- Layer 4: one lane-dense (B, TN) output tile per grid step.
    o_ref[...] = (
        jnp.dot(h3_ref[...], w4_ref[...], preferred_element_type=jnp.float32)
        + b4_ref[...]
    ).astype(o_ref.dtype)


def _pick_tile_n(out_dim, tn_max):
    """Largest multiple of 128 that divides out_dim and is <= tn_max."""
    tn_max = max(int(tn_max), 128)
    if out_dim % 128 != 0:
        return out_dim            # small / irregular out_dim: single untiled block
    best = 128
    t = 256
    while t <= min(tn_max, out_dim):
        if out_dim % t == 0:
            best = t
        t += 128
    return best


@functools.partial(jax.jit, static_argnames=("compute_dtype", "tn"))
def prediction_mlp(x, params, compute_dtype=jnp.float32, tn=512):
    """x: (B, in_dim) f32. params: dict from init_params.

    compute_dtype: dtype of matmul operands (bf16 recommended on v6e/v7x; accumulation
    and BN/ReLU stay f32).  tn: max layer-4 output tile width (multiple of 128).
    """
    B, in_dim = x.shape
    h1 = params["w1"].shape[1]
    h2 = params["w2"].shape[1]
    k3, out_dim = params["w4"].shape
    inv_b = 1.0 / B

    tile_n = _pick_tile_n(out_dim, tn)
    grid = (out_dim // tile_n,)

    # Ship matmul weights pre-cast to compute_dtype (halves weight DMA + VMEM in bf16
    # mode and removes in-kernel convert ops). BN params and b4 stay f32.
    w1 = params["w1"].astype(compute_dtype)
    w2 = params["w2"].astype(compute_dtype)
    w3 = params["w3"].astype(compute_dtype)
    w4 = params["w4"].astype(compute_dtype)

    cd_bytes = jnp.dtype(compute_dtype).itemsize

    # Conservative VMEM estimate (resident head operands + double-buffered layer-4
    # tiles + scratch), with generous headroom, clamped to [32 MiB, 64 MiB] so it is
    # valid on v5e/v6e (128 MiB physical) and v7x (64 MiB physical).
    resident = (B * max(in_dim, 128) + in_dim * h1 + h1 * h2
                + h2 * max(k3, 128)) * cd_bytes \
        + 2 * (h1 + h2 + max(k3, 128)) * 4 \
        + B * max(h1, 128) * 4
    tiles = 2 * (max(k3, 8) * tile_n * cd_bytes + tile_n * 4 + B * tile_n * 4)
    scratch = B * max(k3, 128) * cd_bytes
    vmem_bytes = int(2 * (resident + tiles + scratch)) + (4 << 20)
    vmem_bytes = min(max(vmem_bytes, 32 << 20), 64 << 20)

    const2 = lambda j: (0, 0)
    in_specs = [
        pl.BlockSpec((B, in_dim), const2),           # x         (resident)
        pl.BlockSpec((in_dim, h1), const2),          # w1        (resident)
        pl.BlockSpec((1, h1), const2),               # gamma1
        pl.BlockSpec((1, h1), const2),               # beta1
        pl.BlockSpec((h1, h2), const2),              # w2
        pl.BlockSpec((1, h2), const2),               # gamma2
        pl.BlockSpec((1, h2), const2),               # beta2
        pl.BlockSpec((h2, k3), const2),              # w3
        pl.BlockSpec((1, k3), const2),               # gamma3
        pl.BlockSpec((1, k3), const2),               # beta3
        pl.BlockSpec((k3, tile_n), lambda j: (0, j)),  # w4 tile
        pl.BlockSpec((1, tile_n), lambda j: (0, j)),   # b4 tile
    ]
    out_spec = pl.BlockSpec((B, tile_n), lambda j: (0, j))

    out = pl.pallas_call(
        functools.partial(_pred_mlp_kernel, inv_b=inv_b, compute_dtype=compute_dtype),
        out_shape=jax.ShapeDtypeStruct((B, out_dim), jnp.float32),
        grid_spec=pltpu.PrefetchScalarGridSpec(
            num_scalar_prefetch=0,
            grid=grid,
            in_specs=in_specs,
            out_specs=out_spec,
            scratch_shapes=[pltpu.VMEM((B, k3), compute_dtype)],
        ),
        compiler_params=pltpu.CompilerParams(
            dimension_semantics=("arbitrary",),   # step-0 head must stay serial
            vmem_limit_bytes=vmem_bytes,
        ),
    )(x, w1, params["g1"], params["be1"],
      w2, params["g2"], params["be2"],
      w3, params["g3"], params["be3"],
      w4, params["b4"])
    return out


def init_params(key, in_dim, hidden_dims=(256, 64, 16), out_dim=2048):
    """Deterministic synthetic init (PyTorch-like uniform bound 1/sqrt(fan_in);
    BN gamma=1, beta=0). b1-b3 are kept for the reference even though the kernel
    provably does not need them (training-mode BN cancels them)."""
    dims = [in_dim, *hidden_dims, out_dim]
    params = {}
    keys = jax.random.split(key, 8)
    for li in range(4):
        fan_in, fan_out = dims[li], dims[li + 1]
        bound = 1.0 / jnp.sqrt(float(fan_in))
        params[f"w{li + 1}"] = jax.random.uniform(
            keys[2 * li], (fan_in, fan_out), minval=-bound, maxval=bound,
            dtype=jnp.float32)
        params[f"b{li + 1}"] = jax.random.uniform(
            keys[2 * li + 1], (1, fan_out), minval=-bound, maxval=bound,
            dtype=jnp.float32)
        if li < 3:
            params[f"g{li + 1}"] = jnp.ones((1, fan_out), jnp.float32)
            params[f"be{li + 1}"] = jnp.zeros((1, fan_out), jnp.float32)
    return params


def _reference(x, params):
    """Pure-JAX reference matching the PyTorch module (biases included,
    two-pass BN) -- verifies the kernel's algebraic simplifications."""
    def bn_relu(h, g, b):
        mean = jnp.mean(h, axis=0, keepdims=True)
        var = jnp.mean((h - mean) ** 2, axis=0, keepdims=True)
        h = (h - mean) * jax.lax.rsqrt(var + EPS) * g + b
        return jnp.maximum(h, 0.0)

    h = bn_relu(x @ params["w1"] + params["b1"], params["g1"], params["be1"])
    h = bn_relu(h @ params["w2"] + params["b2"], params["g2"], params["be2"])
    h = bn_relu(h @ params["w3"] + params["b3"], params["g3"], params["be3"])
    return h @ params["w4"] + params["b4"]


if __name__ == "__main__":
    key = jax.random.PRNGKey(0)
    k_x, k_p = jax.random.split(key)

    B, in_dim = 8, 32
    x = jax.random.normal(k_x, (B, in_dim), dtype=jnp.float32)
    params = init_params(k_p, in_dim, hidden_dims=(256, 64, 16), out_dim=2048)

    ref = _reference(x, params)

    # f32 path: must match the PyTorch-equivalent reference tightly.
    out = jax.block_until_ready(prediction_mlp(x, params))
    assert out.shape == (B, 2048), out.shape
    assert jnp.allclose(out, ref, atol=1e-4, rtol=1e-4), "f32 mismatch vs reference"

    # bf16-operand path (weights shipped as bf16); loose tolerance vs f32 reference.
    out_bf16 = jax.block_until_ready(
        prediction_mlp(x, params, compute_dtype=jnp.bfloat16))
    assert jnp.allclose(out_bf16, ref, atol=1e-1, rtol=1e-1), "bf16 mismatch vs reference"

    print("KERNEL_OK")
</pallas_src>

<mosaic_0001>
module attributes {stable_mosaic.version = 11 : i64} {
  func.func @_pred_mlp_kernel(%arg0: i32, %arg1: memref<8x32xf32, #tpu.memory_space<vmem>>, %arg2: memref<32x256xf32, #tpu.memory_space<vmem>>, %arg3: memref<1x256xf32, #tpu.memory_space<vmem>>, %arg4: memref<1x256xf32, #tpu.memory_space<vmem>>, %arg5: memref<256x64xf32, #tpu.memory_space<vmem>>, %arg6: memref<1x64xf32, #tpu.memory_space<vmem>>, %arg7: memref<1x64xf32, #tpu.memory_space<vmem>>, %arg8: memref<64x16xf32, #tpu.memory_space<vmem>>, %arg9: memref<1x16xf32, #tpu.memory_space<vmem>>, %arg10: memref<1x16xf32, #tpu.memory_space<vmem>>, %arg11: memref<16x512xf32, #tpu.memory_space<vmem>>, %arg12: memref<1x512xf32, #tpu.memory_space<vmem>>, %arg13: memref<8x512xf32, #tpu.memory_space<vmem>>, %arg14: memref<8x16xf32, #tpu.memory_space<vmem>>) attributes {dimension_semantics = [#tpu.dimension_semantics<arbitrary>], iteration_bounds = array<i64: 4>, scalar_prefetch = 0 : i64, scratch_operands = 1 : i64, tpu.core_type = #tpu.core_type<tc>, window_params = [{pipeline_mode = #tpu.pipeline_mode<synchronous>, transform_indices = @transform_0, window_bounds = array<i64: 8, 32>}, {pipeline_mode = #tpu.pipeline_mode<synchronous>, transform_indices = @transform_1, window_bounds = array<i64: 32, 256>}, {pipeline_mode = #tpu.pipeline_mode<synchronous>, transform_indices = @transform_2, window_bounds = array<i64: 1, 256>}, {pipeline_mode = #tpu.pipeline_mode<synchronous>, transform_indices = @transform_3, window_bounds = array<i64: 1, 256>}, {pipeline_mode = #tpu.pipeline_mode<synchronous>, transform_indices = @transform_4, window_bounds = array<i64: 256, 64>}, {pipeline_mode = #tpu.pipeline_mode<synchronous>, transform_indices = @transform_5, window_bounds = array<i64: 1, 64>}, {pipeline_mode = #tpu.pipeline_mode<synchronous>, transform_indices = @transform_6, window_bounds = array<i64: 1, 64>}, {pipeline_mode = #tpu.pipeline_mode<synchronous>, transform_indices = @transform_7, window_bounds = array<i64: 64, 16>}, {pipeline_mode = #tpu.pipeline_mode<synchronous>, transform_indices = @transform_8, window_bounds = array<i64: 1, 16>}, {pipeline_mode = #tpu.pipeline_mode<synchronous>, transform_indices = @transform_9, window_bounds = array<i64: 1, 16>}, {transform_indices = @transform_10, window_bounds = array<i64: 16, 512>}, {transform_indices = @transform_11, window_bounds = array<i64: 1, 512>}, {transform_indices = @transform_12, window_bounds = array<i64: 8, 512>}]} {
    %c0_i32 = arith.constant 0 : i32
    %0 = arith.cmpi eq, %arg0, %c0_i32 : i32
    %1 = arith.extui %0 : i1 to i32
    %c0_i32_0 = arith.constant 0 : i32
    %2 = arith.cmpi ne, %1, %c0_i32_0 : i32
    scf.if %2 {
      %c0_8 = arith.constant 0 : index
      %c0_9 = arith.constant 0 : index
      %10 = vector.load %arg1[%c0_8, %c0_9] : memref<8x32xf32, #tpu.memory_space<vmem>>, vector<8x32xf32>
      %c0_10 = arith.constant 0 : index
      %c0_11 = arith.constant 0 : index
      %11 = vector.load %arg2[%c0_10, %c0_11] : memref<32x256xf32, #tpu.memory_space<vmem>>, vector<32x256xf32>
      %cst_12 = arith.constant dense<0.000000e+00> : vector<8x256xf32>
      %12 = tpu.matmul %10, %11, %cst_12 {dimension_numbers = #tpu.dot_dimension_numbers<[1], [0], [0], [1], [0, 0, 1, 1], [], []>} : vector<8x32xf32>, vector<32x256xf32>, vector<8x256xf32> -> vector<8x256xf32>
      %c0_13 = arith.constant 0 : index
      %c0_14 = arith.constant 0 : index
      %13 = vector.load %arg3[%c0_13, %c0_14] : memref<1x256xf32, #tpu.memory_space<vmem>>, vector<1x256xf32>
      %c0_15 = arith.constant 0 : index
      %c0_16 = arith.constant 0 : index
      %14 = vector.load %arg4[%c0_15, %c0_16] : memref<1x256xf32, #tpu.memory_space<vmem>>, vector<1x256xf32>
      %cst_17 = arith.constant dense<0.000000e+00> : vector<256xf32>
      %15 = vector.multi_reduction <add>, %12, %cst_17 [0] : vector<8x256xf32> to vector<256xf32>
      %16 = vector.shape_cast %15 : vector<256xf32> to vector<1x256xf32>
      %cst_18 = arith.constant 1.250000e-01 : f32
      %17 = vector.broadcast %cst_18 : f32 to vector<1x256xf32>
      %18 = arith.mulf %16, %17 : vector<1x256xf32>
      %19 = arith.mulf %12, %12 : vector<8x256xf32>
      %cst_19 = arith.constant dense<0.000000e+00> : vector<256xf32>
      %20 = vector.multi_reduction <add>, %19, %cst_19 [0] : vector<8x256xf32> to vector<256xf32>
      %21 = vector.shape_cast %20 : vector<256xf32> to vector<1x256xf32>
      %cst_20 = arith.constant 1.250000e-01 : f32
      %22 = vector.broadcast %cst_20 : f32 to vector<1x256xf32>
      %23 = arith.mulf %21, %22 : vector<1x256xf32>
      %24 = arith.mulf %18, %18 : vector<1x256xf32>
      %25 = arith.subf %23, %24 : vector<1x256xf32>
      %cst_21 = arith.constant 0.000000e+00 : f32
      %26 = vector.broadcast %cst_21 : f32 to vector<1x256xf32>
      %27 = arith.maximumf %25, %26 : vector<1x256xf32>
      %cst_22 = arith.constant 9.99999974E-6 : f32
      %28 = vector.broadcast %cst_22 : f32 to vector<1x256xf32>
      %29 = arith.addf %27, %28 : vector<1x256xf32>
      %30 = math.rsqrt %29 : vector<1x256xf32>
      %31 = arith.mulf %30, %13 : vector<1x256xf32>
      %32 = arith.mulf %18, %31 : vector<1x256xf32>
      %33 = arith.subf %14, %32 : vector<1x256xf32>
      %34 = vector.broadcast %31 : vector<1x256xf32> to vector<8x256xf32>
      %35 = arith.mulf %12, %34 : vector<8x256xf32>
      %36 = vector.broadcast %33 : vector<1x256xf32> to vector<8x256xf32>
      %37 = arith.addf %35, %36 : vector<8x256xf32>
      %cst_23 = arith.constant 0.000000e+00 : f32
      %38 = vector.broadcast %cst_23 : f32 to vector<8x256xf32>
      %39 = arith.maximumf %37, %38 : vector<8x256xf32>
      %c0_24 = arith.constant 0 : index
      %c0_25 = arith.constant 0 : index
      %40 = vector.load %arg5[%c0_24, %c0_25] : memref<256x64xf32, #tpu.memory_space<vmem>>, vector<256x64xf32>
      %cst_26 = arith.constant dense<0.000000e+00> : vector<8x64xf32>
      %41 = tpu.matmul %39, %40, %cst_26 {dimension_numbers = #tpu.dot_dimension_numbers<[1], [0], [0], [1], [0, 0, 1, 1], [], []>} : vector<8x256xf32>, vector<256x64xf32>, vector<8x64xf32> -> vector<8x64xf32>
      %c0_27 = arith.constant 0 : index
      %c0_28 = arith.constant 0 : index
      %42 = vector.load %arg6[%c0_27, %c0_28] : memref<1x64xf32, #tpu.memory_space<vmem>>, vector<1x64xf32>
      %c0_29 = arith.constant 0 : index
      %c0_30 = arith.constant 0 : index
      %43 = vector.load %arg7[%c0_29, %c0_30] : memref<1x64xf32, #tpu.memory_space<vmem>>, vector<1x64xf32>
      %cst_31 = arith.constant dense<0.000000e+00> : vector<64xf32>
      %44 = vector.multi_reduction <add>, %41, %cst_31 [0] : vector<8x64xf32> to vector<64xf32>
      %45 = vector.shape_cast %44 : vector<64xf32> to vector<1x64xf32>
      %cst_32 = arith.constant 1.250000e-01 : f32
      %46 = vector.broadcast %cst_32 : f32 to vector<1x64xf32>
      %47 = arith.mulf %45, %46 : vector<1x64xf32>
      %48 = arith.mulf %41, %41 : vector<8x64xf32>
      %cst_33 = arith.constant dense<0.000000e+00> : vector<64xf32>
      %49 = vector.multi_reduction <add>, %48, %cst_33 [0] : vector<8x64xf32> to vector<64xf32>
      %50 = vector.shape_cast %49 : vector<64xf32> to vector<1x64xf32>
      %cst_34 = arith.constant 1.250000e-01 : f32
      %51 = vector.broadcast %cst_34 : f32 to vector<1x64xf32>
      %52 = arith.mulf %50, %51 : vector<1x64xf32>
      %53 = arith.mulf %47, %47 : vector<1x64xf32>
      %54 = arith.subf %52, %53 : vector<1x64xf32>
      %cst_35 = arith.constant 0.000000e+00 : f32
      %55 = vector.broadcast %cst_35 : f32 to vector<1x64xf32>
      %56 = arith.maximumf %54, %55 : vector<1x64xf32>
      %cst_36 = arith.constant 9.99999974E-6 : f32
      %57 = vector.broadcast %cst_36 : f32 to vector<1x64xf32>
      %58 = arith.addf %56, %57 : vector<1x64xf32>
      %59 = math.rsqrt %58 : vector<1x64xf32>
      %60 = arith.mulf %59, %42 : vector<1x64xf32>
      %61 = arith.mulf %47, %60 : vector<1x64xf32>
      %62 = arith.subf %43, %61 : vector<1x64xf32>
      %63 = vector.broadcast %60 : vector<1x64xf32> to vector<8x64xf32>
      %64 = arith.mulf %41, %63 : vector<8x64xf32>
      %65 = vector.broadcast %62 : vector<1x64xf32> to vector<8x64xf32>
      %66 = arith.addf %64, %65 : vector<8x64xf32>
      %cst_37 = arith.constant 0.000000e+00 : f32
      %67 = vector.broadcast %cst_37 : f32 to vector<8x64xf32>
      %68 = arith.maximumf %66, %67 : vector<8x64xf32>
      %c0_38 = arith.constant 0 : index
      %c0_39 = arith.constant 0 : index
      %69 = vector.load %arg8[%c0_38, %c0_39] : memref<64x16xf32, #tpu.memory_space<vmem>>, vector<64x16xf32>
      %cst_40 = arith.constant dense<0.000000e+00> : vector<8x16xf32>
      %70 = tpu.matmul %68, %69, %cst_40 {dimension_numbers = #tpu.dot_dimension_numbers<[1], [0], [0], [1], [0, 0, 1, 1], [], []>} : vector<8x64xf32>, vector<64x16xf32>, vector<8x16xf32> -> vector<8x16xf32>
      %c0_41 = arith.constant 0 : index
      %c0_42 = arith.constant 0 : index
      %71 = vector.load %arg9[%c0_41, %c0_42] : memref<1x16xf32, #tpu.memory_space<vmem>>, vector<1x16xf32>
      %c0_43 = arith.constant 0 : index
      %c0_44 = arith.constant 0 : index
      %72 = vector.load %arg10[%c0_43, %c0_44] : memref<1x16xf32, #tpu.memory_space<vmem>>, vector<1x16xf32>
      %cst_45 = arith.constant dense<0.000000e+00> : vector<16xf32>
      %73 = vector.multi_reduction <add>, %70, %cst_45 [0] : vector<8x16xf32> to vector<16xf32>
      %74 = vector.shape_cast %73 : vector<16xf32> to vector<1x16xf32>
      %cst_46 = arith.constant 1.250000e-01 : f32
      %75 = vector.broadcast %cst_46 : f32 to vector<1x16xf32>
      %76 = arith.mulf %74, %75 : vector<1x16xf32>
      %77 = arith.mulf %70, %70 : vector<8x16xf32>
      %cst_47 = arith.constant dense<0.000000e+00> : vector<16xf32>
      %78 = vector.multi_reduction <add>, %77, %cst_47 [0] : vector<8x16xf32> to vector<16xf32>
      %79 = vector.shape_cast %78 : vector<16xf32> to vector<1x16xf32>
      %cst_48 = arith.constant 1.250000e-01 : f32
      %80 = vector.broadcast %cst_48 : f32 to vector<1x16xf32>
      %81 = arith.mulf %79, %80 : vector<1x16xf32>
      %82 = arith.mulf %76, %76 : vector<1x16xf32>
      %83 = arith.subf %81, %82 : vector<1x16xf32>
      %cst_49 = arith.constant 0.000000e+00 : f32
      %84 = vector.broadcast %cst_49 : f32 to vector<1x16xf32>
      %85 = arith.maximumf %83, %84 : vector<1x16xf32>
      %cst_50 = arith.constant 9.99999974E-6 : f32
      %86 = vector.broadcast %cst_50 : f32 to vector<1x16xf32>
      %87 = arith.addf %85, %86 : vector<1x16xf32>
      %88 = math.rsqrt %87 : vector<1x16xf32>
      %89 = arith.mulf %88, %71 : vector<1x16xf32>
      %90 = arith.mulf %76, %89 : vector<1x16xf32>
      %91 = arith.subf %72, %90 : vector<1x16xf32>
      %92 = vector.broadcast %89 : vector<1x16xf32> to vector<8x16xf32>
      %93 = arith.mulf %70, %92 : vector<8x16xf32>
      %94 = vector.broadcast %91 : vector<1x16xf32> to vector<8x16xf32>
      %95 = arith.addf %93, %94 : vector<8x16xf32>
      %cst_51 = arith.constant 0.000000e+00 : f32
      %96 = vector.broadcast %cst_51 : f32 to vector<8x16xf32>
      %97 = arith.maximumf %95, %96 : vector<8x16xf32>
      %c0_52 = arith.constant 0 : index
      %c0_53 = arith.constant 0 : index
      %98 = vector.load %arg14[%c0_52, %c0_53] : memref<8x16xf32, #tpu.memory_space<vmem>>, vector<8x16xf32>
      tpu.vector_store %arg14[%c0_52, %c0_53], %97 {strides = array<i32>} : memref<8x16xf32, #tpu.memory_space<vmem>>, vector<8x16xf32>,
    } else {
    }
    %c0 = arith.constant 0 : index
    %c0_1 = arith.constant 0 : index
    %3 = vector.load %arg14[%c0, %c0_1] : memref<8x16xf32, #tpu.memory_space<vmem>>, vector<8x16xf32>
    %c0_2 = arith.constant 0 : index
    %c0_3 = arith.constant 0 : index
    %4 = vector.load %arg11[%c0_2, %c0_3] : memref<16x512xf32, #tpu.memory_space<vmem>>, vector<16x512xf32>
    %cst = arith.constant dense<0.000000e+00> : vector<8x512xf32>
    %5 = tpu.matmul %3, %4, %cst {dimension_numbers = #tpu.dot_dimension_numbers<[1], [0], [0], [1], [0, 0, 1, 1], [], []>} : vector<8x16xf32>, vector<16x512xf32>, vector<8x512xf32> -> vector<8x512xf32>
    %c0_4 = arith.constant 0 : index
    %c0_5 = arith.constant 0 : index
    %6 = vector.load %arg12[%c0_4, %c0_5] : memref<1x512xf32, #tpu.memory_space<vmem>>, vector<1x512xf32>
    %7 = vector.broadcast %6 : vector<1x512xf32> to vector<8x512xf32>
    %8 = arith.addf %5, %7 : vector<8x512xf32>
    %c0_6 = arith.constant 0 : index
    %c0_7 = arith.constant 0 : index
    %9 = vector.load %arg13[%c0_6, %c0_7] : memref<8x512xf32, #tpu.memory_space<vmem>>, vector<8x512xf32>
    tpu.vector_store %arg13[%c0_6, %c0_7], %8 {strides = array<i32>} : memref<8x512xf32, #tpu.memory_space<vmem>>, vector<8x512xf32>,
    return
  }
  func.func @transform_0(%arg0: i32) -> (i32, i32) {
    %c0_i32 = arith.constant 0 : i32
    %c0_i32_0 = arith.constant 0 : i32
    %c0_i32_1 = arith.constant 0 : i32
    return %c0_i32, %c0_i32_0 : i32, i32
  }
  func.func @transform_1(%arg0: i32) -> (i32, i32) {
    %c0_i32 = arith.constant 0 : i32
    %c0_i32_0 = arith.constant 0 : i32
    %c0_i32_1 = arith.constant 0 : i32
    return %c0_i32, %c0_i32_0 : i32, i32
  }
  func.func @transform_2(%arg0: i32) -> (i32, i32) {
    %c0_i32 = arith.constant 0 : i32
    %c0_i32_0 = arith.constant 0 : i32
    %c0_i32_1 = arith.constant 0 : i32
    return %c0_i32, %c0_i32_0 : i32, i32
  }
  func.func @transform_3(%arg0: i32) -> (i32, i32) {
    %c0_i32 = arith.constant 0 : i32
    %c0_i32_0 = arith.constant 0 : i32
    %c0_i32_1 = arith.constant 0 : i32
    return %c0_i32, %c0_i32_0 : i32, i32
  }
  func.func @transform_4(%arg0: i32) -> (i32, i32) {
    %c0_i32 = arith.constant 0 : i32
    %c0_i32_0 = arith.constant 0 : i32
    %c0_i32_1 = arith.constant 0 : i32
    return %c0_i32, %c0_i32_0 : i32, i32
  }
  func.func @transform_5(%arg0: i32) -> (i32, i32) {
    %c0_i32 = arith.constant 0 : i32
    %c0_i32_0 = arith.constant 0 : i32
    %c0_i32_1 = arith.constant 0 : i32
    return %c0_i32, %c0_i32_0 : i32, i32
  }
  func.func @transform_6(%arg0: i32) -> (i32, i32) {
    %c0_i32 = arith.constant 0 : i32
    %c0_i32_0 = arith.constant 0 : i32
    %c0_i32_1 = arith.constant 0 : i32
    return %c0_i32, %c0_i32_0 : i32, i32
  }
  func.func @transform_7(%arg0: i32) -> (i32, i32) {
    %c0_i32 = arith.constant 0 : i32
    %c0_i32_0 = arith.constant 0 : i32
    %c0_i32_1 = arith.constant 0 : i32
    return %c0_i32, %c0_i32_0 : i32, i32
  }
  func.func @transform_8(%arg0: i32) -> (i32, i32) {
    %c0_i32 = arith.constant 0 : i32
    %c0_i32_0 = arith.constant 0 : i32
    %c0_i32_1 = arith.constant 0 : i32
    return %c0_i32, %c0_i32_0 : i32, i32
  }
  func.func @transform_9(%arg0: i32) -> (i32, i32) {
    %c0_i32 = arith.constant 0 : i32
    %c0_i32_0 = arith.constant 0 : i32
    %c0_i32_1 = arith.constant 0 : i32
    return %c0_i32, %c0_i32_0 : i32, i32
  }
  func.func @transform_10(%arg0: i32) -> (i32, i32) {
    %c0_i32 = arith.constant 0 : i32
    %c0_i32_0 = arith.constant 0 : i32
    return %c0_i32, %arg0 : i32, i32
  }
  func.func @transform_11(%arg0: i32) -> (i32, i32) {
    %c0_i32 = arith.constant 0 : i32
    %c0_i32_0 = arith.constant 0 : i32
    return %c0_i32, %arg0 : i32, i32
  }
  func.func @transform_12(%arg0: i32) -> (i32, i32) {
    %c0_i32 = arith.constant 0 : i32
    %c0_i32_0 = arith.constant 0 : i32
    return %c0_i32, %arg0 : i32, i32
  }
}

</mosaic_0001>

<llo_original>
// kernel: prediction_mlp.1
$region0: #{prediction_mlp.1}
  #allocation0 [shape = 'u32[]', space=smem, size = 0x4, offset = 0x4, fixed_abs, tag = 'smem constant byte address 0x4 - core index']
  #allocation1 [shape = 'u32[144,128]{1,0:T(1,128)}', space=vmem, size = 0x12000, scoped, tag = 'internal scratch']
  #allocation2 [shape = 'f32[8,16]{1,0:T(8,128)}', space=vmem, size = 0x1000, scoped, tag = 'scratch operand']
  %s0 = inlined_call_operand.vmem [shape: f32[8,32], index: 0, kind: input, shape index: {}]
  %s1 = inlined_call_operand.vmem [shape: f32[32,256], index: 1, kind: input, shape index: {}]
  %s2 = inlined_call_operand.vmem [shape: f32[1,256], index: 2, kind: input, shape index: {}]
  %s3 = inlined_call_operand.vmem [shape: f32[1,256], index: 3, kind: input, shape index: {}]
  %s4 = inlined_call_operand.vmem [shape: f32[256,64], index: 4, kind: input, shape index: {}]
  %s5 = inlined_call_operand.vmem [shape: f32[1,64], index: 5, kind: input, shape index: {}]
  %s6 = inlined_call_operand.vmem [shape: f32[1,64], index: 6, kind: input, shape index: {}]
  %s7 = inlined_call_operand.vmem [shape: f32[64,16], index: 7, kind: input, shape index: {}]
  %s8 = inlined_call_operand.vmem [shape: f32[1,16], index: 8, kind: input, shape index: {}]
  %s9 = inlined_call_operand.vmem [shape: f32[1,16], index: 9, kind: input, shape index: {}]
  %s10 = inlined_call_operand.vmem [shape: f32[16,2048], index: 10, kind: input, shape index: {}]
  %s11 = inlined_call_operand.vmem [shape: f32[1,2048], index: 11, kind: input, shape index: {}]
  %s12 = inlined_call_operand.hbm [shape: f32[8,2048], index: 12, kind: output, shape index: {}]
  %s13 = sld [smem:[#allocation0]]
  $region108: #{prediction_mlp.1} parent=0
    _
  %s15 = ssub.s32 1, %s13
  %s16 = scalar_select 0, %s15, %s13
  $region1: #{prediction_mlp.1} parent=0
    #allocation3 [shape = 'u8[65536]{0}', space=vmem, size = 0x10000, scoped, tag = 'input window, operand 10']
    #allocation4 [shape = 'u8[32768]{0}', space=vmem, size = 0x8000, scoped, tag = 'output window, operand 0']
    #allocation5 [shape = 's32[2]{0}', space=sflag, size = 0x8, scoped, tag = 'scoped memory for prediction_mlp.1']
    %17 = vsyncpa [#allocation5], 0
    %s18 = scalar_lea.sflag [#allocation5], 1
    %19 = vsyncpa %s18, 0
    loop: start=0, step=1, limit=6
    $region2: #{prediction_mlp.1} parent=1 // loop_pre_header
      _
    $region3: #{prediction_mlp.1} parent=1 // loop_header
      %s21 = sphi 0, %s25
      %p22 = scmp.ge.s32.totalorder %s21, 6
      %s29 = sphi 0, %s29
      %s31 = sphi 0, %s29
      %s32 = sphi 0, %s31
      %s46 = sphi 0, %s32
      %s50 = sphi 0, %s50
      %s52 = sphi 0, %s50
      %s53 = sphi 0, %s52
      %s67 = sphi 0, %s53
      %s71 = sphi 0, %s71
      %s73 = sphi 0, %s71
      %s74 = sphi 0, %s73
      %s88 = sphi 0, %s74
      %s92 = sphi 0, %s92
      %s94 = sphi 0, %s92
      %s95 = sphi 0, %s94
      %s109 = sphi 0, %s95
      %s113 = sphi 0, %s113
      %s115 = sphi 0, %s113
      %s116 = sphi 0, %s115
      %s130 = sphi 0, %s116
      %s134 = sphi 0, %s134
      %s136 = sphi 0, %s134
      %s137 = sphi 0, %s136
      %s151 = sphi 0, %s137
      %s155 = sphi 0, %s155
      %s157 = sphi 0, %s155
      %s158 = sphi 0, %s157
      %s172 = sphi 0, %s158
      %s176 = sphi 0, %s176
      %s178 = sphi 0, %s176
      %s179 = sphi 0, %s178
      %s193 = sphi 0, %s179
      %s197 = sphi 0, %s197
      %s199 = sphi 0, %s197
      %s200 = sphi 0, %s199
      %s214 = sphi 0, %s200
      %s218 = sphi 0, %s218
      %s220 = sphi 0, %s218
      %s221 = sphi 0, %s220
      %s235 = sphi 0, %s221
      %s241 = sphi 0, %s243
      %s244 = sphi 0, %s241
      %s245 = sphi 0, %s244
      %s261 = sphi 0, %s245
      %s267 = sphi 0, %s269
      %s270 = sphi 0, %s267
      %s271 = sphi 0, %s270
      %s287 = sphi 0, %s271
      %s293 = sphi 0, %s295
      %s296 = sphi 0, %s293
      %s297 = sphi 0, %s296
      %s313 = sphi 0, %s297
    $region4: #{prediction_mlp.1} parent=1 // loop_header_branch
      %24 = sbr.rel (%p22) target = $region8
    $region5: #{prediction_mlp.1} parent=1 // loop_body
      %s26 = ssub.s32 %s21, 1
      %s27 = ssub.s32 %s21, 2
      %s28 = sadd.s32 %s21, 1
      %s30 = sadd.s32 %s29, 1
      %p33 = scmp.eq.s32.totalorder %s21, 3
      %p34 = scmp.ne.s32.totalorder %s29, %s31
      %p35 = scmp.eq.s32.totalorder %s21, 0
      %p36 = por %p34, %p35
      %p37 = scmp.ne.s32.totalorder %s29, %s31
      %p38 = scmp.eq.s32.totalorder %s26, 3
      %p39 = por %p37, %p38
      %p40 = scmp.ne.s32.totalorder %s31, %s32
      %p41 = scmp.eq.s32.totalorder %s26, 0
      %p42 = por %p40, %p41
      %p43 = scmp.ne.s32.totalorder %s31, %s32
      %p44 = scmp.eq.s32.totalorder %s27, 3
      %p45 = por %p43, %p44
      %p47 = scmp.ne.s32.totalorder %s32, %s46
      %p48 = scmp.eq.s32.totalorder %s27, 0
      %p49 = por %p47, %p48
      %s51 = sadd.s32 %s50, 1
      %p54 = scmp.eq.s32.totalorder %s21, 3
      %p55 = scmp.ne.s32.totalorder %s50, %s52
      %p56 = scmp.eq.s32.totalorder %s21, 0
      %p57 = por %p55, %p56
      %p58 = scmp.ne.s32.totalorder %s50, %s52
      %p59 = scmp.eq.s32.totalorder %s26, 3
      %p60 = por %p58, %p59
      %p61 = scmp.ne.s32.totalorder %s52, %s53
      %p62 = scmp.eq.s32.totalorder %s26, 0
      %p63 = por %p61, %p62
      %p64 = scmp.ne.s32.totalorder %s52, %s53
      %p65 = scmp.eq.s32.totalorder %s27, 3
      %p66 = por %p64, %p65
      %p68 = scmp.ne.s32.totalorder %s53, %s67
      %p69 = scmp.eq.s32.totalorder %s27, 0
      %p70 = por %p68, %p69
      %s72 = sadd.s32 %s71, 1
      %p75 = scmp.eq.s32.totalorder %s21, 3
      %p76 = scmp.ne.s32.totalorder %s71, %s73
      %p77 = scmp.eq.s32.totalorder %s21, 0
      %p78 = por %p76, %p77
      %p79 = scmp.ne.s32.totalorder %s71, %s73
      %p80 = scmp.eq.s32.totalorder %s26, 3
      %p81 = por %p79, %p80
      %p82 = scmp.ne.s32.totalorder %s73, %s74
      %p83 = scmp.eq.s32.totalorder %s26, 0
      %p84 = por %p82, %p83
      %p85 = scmp.ne.s32.totalorder %s73, %s74
      %p86 = scmp.eq.s32.totalorder %s27, 3
      %p87 = por %p85, %p86
      %p89 = scmp.ne.s32.totalorder %s74, %s88
      %p90 = scmp.eq.s32.totalorder %s27, 0
      %p91 = por %p89, %p90
      %s93 = sadd.s32 %s92, 1
      %p96 = scmp.eq.s32.totalorder %s21, 3
      %p97 = scmp.ne.s32.totalorder %s92, %s94
      %p98 = scmp.eq.s32.totalorder %s21, 0
      %p99 = por %p97, %p98
      %p100 = scmp.ne.s32.totalorder %s92, %s94
      %p101 = scmp.eq.s32.totalorder %s26, 3
      %p102 = por %p100, %p101
      %p103 = scmp.ne.s32.totalorder %s94, %s95
      %p104 = scmp.eq.s32.totalorder %s26, 0
      %p105 = por %p103, %p104
      %p106 = scmp.ne.s32.totalorder %s94, %s95
      %p107 = scmp.eq.s32.totalorder %s27, 3
      %p108 = por %p106, %p107
      %p110 = scmp.ne.s32.totalorder %s95, %s109
      %p111 = scmp.eq.s32.totalorder %s27, 0
      %p112 = por %p110, %p111
      %s114 = sadd.s32 %s113, 1
      %p117 = scmp.eq.s32.totalorder %s21, 3
      %p118 = scmp.ne.s32.totalorder %s113, %s115
      %p119 = scmp.eq.s32.totalorder %s21, 0
      %p120 = por %p118, %p119
      %p121 = scmp.ne.s32.totalorder %s113, %s115
      %p122 = scmp.eq.s32.totalorder %s26, 3
      %p123 = por %p121, %p122
      %p124 = scmp.ne.s32.totalorder %s115, %s116
      %p125 = scmp.eq.s32.totalorder %s26, 0
      %p126 = por %p124, %p125
      %p127 = scmp.ne.s32.totalorder %s115, %s116
      %p128 = scmp.eq.s32.totalorder %s27, 3
      %p129 = por %p127, %p128
      %p131 = scmp.ne.s32.totalorder %s116, %s130
      %p132 = scmp.eq.s32.totalorder %s27, 0
      %p133 = por %p131, %p132
      %s135 = sadd.s32 %s134, 1
      %p138 = scmp.eq.s32.totalorder %s21, 3
      %p139 = scmp.ne.s32.totalorder %s134, %s136
      %p140 = scmp.eq.s32.totalorder %s21, 0
      %p141 = por %p139, %p140
      %p142 = scmp.ne.s32.totalorder %s134, %s136
      %p143 = scmp.eq.s32.totalorder %s26, 3
      %p144 = por %p142, %p143
      %p145 = scmp.ne.s32.totalorder %s136, %s137
      %p146 = scmp.eq.s32.totalorder %s26, 0
      %p147 = por %p145, %p146
      %p148 = scmp.ne.s32.totalorder %s136, %s137
      %p149 = scmp.eq.s32.totalorder %s27, 3
      %p150 = por %p148, %p149
      %p152 = scmp.ne.s32.totalorder %s137, %s151
      %p153 = scmp.eq.s32.totalorder %s27, 0
      %p154 = por %p152, %p153
      %s156 = sadd.s32 %s155, 1
      %p159 = scmp.eq.s32.totalorder %s21, 3
      %p160 = scmp.ne.s32.totalorder %s155, %s157
      %p161 = scmp.eq.s32.totalorder %s21, 0
      %p162 = por %p160, %p161
      %p163 = scmp.ne.s32.totalorder %s155, %s157
      %p164 = scmp.eq.s32.totalorder %s26, 3
      %p165 = por %p163, %p164
      %p166 = scmp.ne.s32.totalorder %s157, %s158
      %p167 = scmp.eq.s32.totalorder %s26, 0
      %p168 = por %p166, %p167
      %p169 = scmp.ne.s32.totalorder %s157, %s158
      %p170 = scmp.eq.s32.totalorder %s27, 3
      %p171 = por %p169, %p170
      %p173 = scmp.ne.s32.totalorder %s158, %s172
      %p174 = scmp.eq.s32.totalorder %s27, 0
      %p175 = por %p173, %p174
      %s177 = sadd.s32 %s176, 1
      %p180 = scmp.eq.s32.totalorder %s21, 3
      %p181 = scmp.ne.s32.totalorder %s176, %s178
      %p182 = scmp.eq.s32.totalorder %s21, 0
      %p183 = por %p181, %p182
      %p184 = scmp.ne.s32.totalorder %s176, %s178
      %p185 = scmp.eq.s32.totalorder %s26, 3
      %p186 = por %p184, %p185
      %p187 = scmp.ne.s32.totalorder %s178, %s179
      %p188 = scmp.eq.s32.totalorder %s26, 0
      %p189 = por %p187, %p188
      %p190 = scmp.ne.s32.totalorder %s178, %s179
      %p191 = scmp.eq.s32.totalorder %s27, 3
      %p192 = por %p190, %p191
      %p194 = scmp.ne.s32.totalorder %s179, %s193
      %p195 = scmp.eq.s32.totalorder %s27, 0
      %p196 = por %p194, %p195
      %s198 = sadd.s32 %s197, 1
      %p201 = scmp.eq.s32.totalorder %s21, 3
      %p202 = scmp.ne.s32.totalorder %s197, %s199
      %p203 = scmp.eq.s32.totalorder %s21, 0
      %p204 = por %p202, %p203
      %p205 = scmp.ne.s32.totalorder %s197, %s199
      %p206 = scmp.eq.s32.totalorder %s26, 3
      %p207 = por %p205, %p206
      %p208 = scmp.ne.s32.totalorder %s199, %s200
      %p209 = scmp.eq.s32.totalorder %s26, 0
      %p210 = por %p208, %p209
      %p211 = scmp.ne.s32.totalorder %s199, %s200
      %p212 = scmp.eq.s32.totalorder %s27, 3
      %p213 = por %p211, %p212
      %p215 = scmp.ne.s32.totalorder %s200, %s214
      %p216 = scmp.eq.s32.totalorder %s27, 0
      %p217 = por %p215, %p216
      %s219 = sadd.s32 %s218, 1
      %p222 = scmp.eq.s32.totalorder %s21, 3
      %p223 = scmp.ne.s32.totalorder %s218, %s220
      %p224 = scmp.eq.s32.totalorder %s21, 0
      %p225 = por %p223, %p224
      %p226 = scmp.ne.s32.totalorder %s218, %s220
      %p227 = scmp.eq.s32.totalorder %s26, 3
      %p228 = por %p226, %p227
      %p229 = scmp.ne.s32.totalorder %s220, %s221
      %p230 = scmp.eq.s32.totalorder %s26, 0
      %p231 = por %p229, %p230
      %p232 = scmp.ne.s32.totalorder %s220, %s221
      %p233 = scmp.eq.s32.totalorder %s27, 3
      %p234 = por %p232, %p233
      %p236 = scmp.ne.s32.totalorder %s221, %s235
      %p237 = scmp.eq.s32.totalorder %s27, 0
      %p238 = por %p236, %p237
      %s239 = ssub.s32 %s21, %s28
      %p240 = scmp.eq.s32.totalorder %s239, 0
      %s242 = sadd.s32 %s241, 1
      %s243 = scalar_select %p240, %s241, %s242
      %p246 = pneg %p240
      %p247 = scmp.eq.s32.totalorder %s21, 3
      %p248 = por %p246, %p247
      %p249 = scmp.ne.s32.totalorder %s241, %s244
      %p250 = scmp.eq.s32.totalorder %s21, 0
      %p251 = por %p249, %p250
      %p252 = scmp.ne.s32.totalorder %s241, %s244
      %p253 = scmp.eq.s32.totalorder %s26, 3
      %p254 = por %p252, %p253
      %p255 = scmp.ne.s32.totalorder %s244, %s245
      %p256 = scmp.eq.s32.totalorder %s26, 0
      %p257 = por %p255, %p256
      %p258 = scmp.ne.s32.totalorder %s244, %s245
      %p259 = scmp.eq.s32.totalorder %s27, 3
      %p260 = por %p258, %p259
      %p262 = scmp.ne.s32.totalorder %s245, %s261
      %p263 = scmp.eq.s32.totalorder %s27, 0
      %p264 = por %p262, %p263
      %s265 = ssub.s32 %s21, %s28
      %p266 = scmp.eq.s32.totalorder %s265, 0
      %s268 = sadd.s32 %s267, 1
      %s269 = scalar_select %p266, %s267, %s268
      %p272 = pneg %p266
      %p273 = scmp.eq.s32.totalorder %s21, 3
      %p274 = por %p272, %p273
      %p275 = scmp.ne.s32.totalorder %s267, %s270
      %p276 = scmp.eq.s32.totalorder %s21, 0
      %p277 = por %p275, %p276
      %p278 = scmp.ne.s32.totalorder %s267, %s270
      %p279 = scmp.eq.s32.totalorder %s26, 3
      %p280 = por %p278, %p279
      %p281 = scmp.ne.s32.totalorder %s270, %s271
      %p282 = scmp.eq.s32.totalorder %s26, 0
      %p283 = por %p281, %p282
      %p284 = scmp.ne.s32.totalorder %s270, %s271
      %p285 = scmp.eq.s32.totalorder %s27, 3
      %p286 = por %p284, %p285
      %p288 = scmp.ne.s32.totalorder %s271, %s287
      %p289 = scmp.eq.s32.totalorder %s27, 0
      %p290 = por %p288, %p289
      %s291 = ssub.s32 %s21, %s28
      %p292 = scmp.eq.s32.totalorder %s291, 0
      %s294 = sadd.s32 %s293, 1
      %s295 = scalar_select %p292, %s293, %s294
      %p298 = pneg %p292
      %p299 = scmp.eq.s32.totalorder %s21, 3
      %p300 = por %p298, %p299
      %p301 = scmp.ne.s32.totalorder %s293, %s296
      %p302 = scmp.eq.s32.totalorder %s21, 0
      %p303 = por %p301, %p302
      %p304 = scmp.ne.s32.totalorder %s293, %s296
      %p305 = scmp.eq.s32.totalorder %s26, 3
      %p306 = por %p304, %p305
      %p307 = scmp.ne.s32.totalorder %s296, %s297
      %p308 = scmp.eq.s32.totalorder %s26, 0
      %p309 = por %p307, %p308
      %p310 = scmp.ne.s32.totalorder %s296, %s297
      %p311 = scmp.eq.s32.totalorder %s27, 3
      %p312 = por %p310, %p311
      %p314 = scmp.ne.s32.totalorder %s297, %s313
      %p315 = scmp.eq.s32.totalorder %s27, 0
      %p316 = por %p314, %p315
      %p317 = scmp.le.s32.totalorder 1, %s21
      %p318 = scmp.lt.s32.totalorder %s21, 5
      %p319 = pnand %p317, %p318
      %p320 = pneg %p319
      // Predicated region
      $region9: #{prediction_mlp.1} parent=5 // pred_check
        _
      $region10: #{prediction_mlp.1} parent=5 // pred_check_branch
        %322 = sbr.rel (%p319) target = $region12
      $region11: #{prediction_mlp.1} parent=5 // pred_region
        %s323 = ssub.s32 %s21, 1
        // Predicated region
        $region13: #{prediction_mlp.1} parent=11 // pred_check
          %p324 = pneg %p42
        $region14: #{prediction_mlp.1} parent=11 // pred_check_branch
          %326 = sbr.rel (%p324) target = $region16
        $region15: #{prediction_mlp.1} parent=11 // pred_region
          _
        $region16: #{prediction_mlp.1} parent=11 // pred_fallthru
          _
        // Predicated region
        $region17: #{prediction_mlp.1} parent=11 // pred_check
          %p327 = pneg %p63
        $region18: #{prediction_mlp.1} parent=11 // pred_check_branch
          %329 = sbr.rel (%p327) target = $region20
        $region19: #{prediction_mlp.1} parent=11 // pred_region
          _
        $region20: #{prediction_mlp.1} parent=11 // pred_fallthru
          _
        // Predicated region
        $region21: #{prediction_mlp.1} parent=11 // pred_check
          %p330 = pneg %p84
        $region22: #{prediction_mlp.1} parent=11 // pred_check_branch
          %332 = sbr.rel (%p330) target = $region24
        $region23: #{prediction_mlp.1} parent=11 // pred_region
          _
        $region24: #{prediction_mlp.1} parent=11 // pred_fallthru
          _
        // Predicated region
        $region25: #{prediction_mlp.1} parent=11 // pred_check
          %p333 = pneg %p105
        $region26: #{prediction_mlp.1} parent=11 // pred_check_branch
          %335 = sbr.rel (%p333) target = $region28
        $region27: #{prediction_mlp.1} parent=11 // pred_region
          _
        $region28: #{prediction_mlp.1} parent=11 // pred_fallthru
          _
        // Predicated region
        $region29: #{prediction_mlp.1} parent=11 // pred_check
          %p336 = pneg %p126
        $region30: #{prediction_mlp.1} parent=11 // pred_check_branch
          %338 = sbr.rel (%p336) target = $region32
        $region31: #{prediction_mlp.1} parent=11 // pred_region
          _
        $region32: #{prediction_mlp.1} parent=11 // pred_fallthru
          _
        // Predicated region
        $region33: #{prediction_mlp.1} parent=11 // pred_check
          %p339 = pneg %p147
        $region34: #{prediction_mlp.1} parent=11 // pred_check_branch
          %341 = sbr.rel (%p339) target = $region36
        $region35: #{prediction_mlp.1} parent=11 // pred_region
          _
        $region36: #{prediction_mlp.1} parent=11 // pred_fallthru
          _
        // Predicated region
        $region37: #{prediction_mlp.1} parent=11 // pred_check
          %p342 = pneg %p168
        $region38: #{prediction_mlp.1} parent=11 // pred_check_branch
          %344 = sbr.rel (%p342) target = $region40
        $region39: #{prediction_mlp.1} parent=11 // pred_region
          _
        $region40: #{prediction_mlp.1} parent=11 // pred_fallthru
          _
        // Predicated region
        $region41: #{prediction_mlp.1} parent=11 // pred_check
          %p345 = pneg %p189
        $region42: #{prediction_mlp.1} parent=11 // pred_check_branch
          %347 = sbr.rel (%p345) target = $region44
        $region43: #{prediction_mlp.1} parent=11 // pred_region
          _
        $region44: #{prediction_mlp.1} parent=11 // pred_fallthru
          _
        // Predicated region
        $region45: #{prediction_mlp.1} parent=11 // pred_check
          %p348 = pneg %p210
        $region46: #{prediction_mlp.1} parent=11 // pred_check_branch
          %350 = sbr.rel (%p348) target = $region48
        $region47: #{prediction_mlp.1} parent=11 // pred_region
          _
        $region48: #{prediction_mlp.1} parent=11 // pred_fallthru
          _
        // Predicated region
        $region49: #{prediction_mlp.1} parent=11 // pred_check
          %p351 = pneg %p231
        $region50: #{prediction_mlp.1} parent=11 // pred_check_branch
          %353 = sbr.rel (%p351) target = $region52
        $region51: #{prediction_mlp.1} parent=11 // pred_region
          _
        $region52: #{prediction_mlp.1} parent=11 // pred_fallthru
          _
      $region12: #{prediction_mlp.1} parent=5 // pred_fallthru
        _
      %p354 = scmp.lt.s32.totalorder %s21, 4
      // Predicated region
      $region53: #{prediction_mlp.1} parent=5 // pred_check
        %p355 = pneg %p354
      $region54: #{prediction_mlp.1} parent=5 // pred_check_branch
        %357 = sbr.rel (%p355) target = $region56
      $region55: #{prediction_mlp.1} parent=5 // pred_region
        // Predicated region
        $region57: #{prediction_mlp.1} parent=55 // pred_check
          %p358 = pneg %p251
        $region58: #{prediction_mlp.1} parent=55 // pred_check_branch
          %360 = sbr.rel (%p358) target = $region60
        $region59: #{prediction_mlp.1} parent=55 // pred_region
          %s361 = sand.u32 %s241, 1
          %s362 = sand.u32 %s241, 1
          %s363 = smul.addr %s362, 64
          %s364 = scalar_lea.vmem [#allocation3], %s363
          %s365 = smul.u32 4, %s21
          %s366 = smul.addr %s365, 8
          %s367 = scalar_lea.vmem %s10, %s366
          // Predicated region
          $region61: #{prediction_mlp.1} parent=59 // pred_check
            _
          $region62: #{prediction_mlp.1} parent=59 // pred_check_branch
            %369 = sbr.rel (0) target = $region64
          $region63: #{prediction_mlp.1} parent=59 // pred_region
            // Predicated region
            $region65: #{prediction_mlp.1} parent=63 // pred_check
              _
            $region66: #{prediction_mlp.1} parent=63 // pred_check_branch
              %371 = sbr.rel (0) target = $region68
            $region67: #{prediction_mlp.1} parent=63 // pred_region
              loop: start=0, step=1, limit=1
              $region69: #{prediction_mlp.1} parent=67 // loop_pre_header
                _
              $region70: #{prediction_mlp.1} parent=67 // loop_header
                %s373 = sphi 0, %s377
                %p374 = scmp.ge.s32.totalorder %s373, 1
                %s378 = sphi %s367, %s367
                %s379 = sphi %s364, %s364
              $region71: #{prediction_mlp.1} parent=67 // loop_header_branch
                %376 = sbr.rel (%p374) target = $region75
              $region72: #{prediction_mlp.1} parent=67 // loop_body
                %v380 = vld [vmem:[%s378] sm:$0xff]
                %381 = vst [vmem:[%s379] sm:$0xff] %v380
                %v382 = vld [vmem:[%s378 + $0x8] sm:$0xff]
                %383 = vst [vmem:[%s379 + $0x8] sm:$0xff] %v382
                %v384 = vld [vmem:[%s378 + $0x10] sm:$0xff]
                %385 = vst [vmem:[%s379 + $0x10] sm:$0xff] %v384
                %v386 = vld [vmem:[%s378 + $0x18] sm:$0xff]
                %387 = vst [vmem:[%s379 + $0x18] sm:$0xff] %v386
                %v388 = vld [vmem:[%s378 + $0x80] sm:$0xff]
                %389 = vst [vmem:[%s379 + $0x20] sm:$0xff] %v388
                %v390 = vld [vmem:[%s378 + $0x88] sm:$0xff]
                %391 = vst [vmem:[%s379 + $0x28] sm:$0xff] %v390
                %v392 = vld [vmem:[%s378 + $0x90] sm:$0xff]
                %393 = vst [vmem:[%s379 + $0x30] sm:$0xff] %v392
                %v394 = vld [vmem:[%s378 + $0x98] sm:$0xff]
                %395 = vst [vmem:[%s379 + $0x38] sm:$0xff] %v394
              $region73: #{prediction_mlp.1} parent=67 // loop_footer
                %s377 = sadd.s32 1, %s373
              $region74: #{prediction_mlp.1} parent=67 // loop_footer_branch
                %372 = sbr.rel target = $region70
              $region75: #{prediction_mlp.1} parent=67 // loop_exit
                _
            $region68: #{prediction_mlp.1} parent=63 // pred_fallthru
              _
            // Predicated region
            $region76: #{prediction_mlp.1} parent=63 // pred_check
              _
            $region77: #{prediction_mlp.1} parent=63 // pred_check_branch
              %397 = sbr.rel target = $region79
            $region78: #{prediction_mlp.1} parent=63 // pred_region
              _
            $region79: #{prediction_mlp.1} parent=63 // pred_fallthru
              _
          $region64: #{prediction_mlp.1} parent=59 // pred_fallthru
            _
          %398 = vnop
        $region60: #{prediction_mlp.1} parent=55 // pred_fallthru
          _
        // Predicated region
        $region80: #{prediction_mlp.1} parent=55 // pred_check
          %p399 = pneg %p277
        $region81: #{prediction_mlp.1} parent=55 // pred_check_branch
          %401 = sbr.rel (%p399) target = $region83
        $region82: #{prediction_mlp.1} parent=55 // pred_region
          %s402 = smul.u32 4, %s21
          %p403 = scmp.lt.s32.totalorder %s402, 15
          %s404 = scalar_select %p403, %s402, 15
          %s405 = scalar_lea.vmem %s11, %s404
          %s406 = smul.u32 4, %s21
        $region83: #{prediction_mlp.1} parent=55 // pred_fallthru
          _
      $region56: #{prediction_mlp.1} parent=5 // pred_fallthru
        _
      %p407 = scmp.le.s32.totalorder 1, %s21
      %p408 = scmp.lt.s32.totalorder %s21, 5
      %p409 = pnand %p407, %p408
      %p410 = pneg %p409
      // Predicated region
      $region84: #{prediction_mlp.1} parent=5 // pred_check
        _
      $region85: #{prediction_mlp.1} parent=5 // pred_check_branch
        %412 = sbr.rel (%p409) target = $region87
      $region86: #{prediction_mlp.1} parent=5 // pred_region
        %s413 = ssub.s32 %s21, 1
        %s414 = sand.u32 %s244, 1
        %s415 = sand.u32 %s244, 1
        %s416 = smul.addr %s415, 64
        %s417 = scalar_lea.vmem [#allocation3], %s416
        // Predicated region
        $region88: #{prediction_mlp.1} parent=86 // pred_check
          %p418 = pneg %p257
        $region89: #{prediction_mlp.1} parent=86 // pred_check_branch
          %420 = sbr.rel (%p418) target = $region91
        $region90: #{prediction_mlp.1} parent=86 // pred_region
          _
        $region91: #{prediction_mlp.1} parent=86 // pred_fallthru
          _
        %p421 = pneg %p42
        %p422 = pneg %p39
        %p423 = pneg %p63
        %p424 = pneg %p60
        %p425 = pneg %p84
        %p426 = pneg %p81
        %p427 = pneg %p105
        %p428 = pneg %p102
        %p429 = pneg %p126
        %p430 = pneg %p123
        %p431 = pneg %p147
        %p432 = pneg %p144
        %p433 = pneg %p168
        %p434 = pneg %p165
        %p435 = pneg %p189
        %p436 = pneg %p186
        %p437 = pneg %p210
        %p438 = pneg %p207
        %p439 = pneg %p231
        %p440 = pneg %p228
        %s441 = sand.u32 %s244, 1
        %s442 = sand.u32 %s244, 1
        %s443 = smul.addr %s442, 64
        %s444 = scalar_lea.vmem [#allocation3], %s443
        %p445 = pneg %p257
        %p446 = pneg %p254
        %s447 = smul.u32 4, %s26
        %p448 = scmp.lt.s32.totalorder %s447, 15
        %s449 = scalar_select %p448, %s447, 15
        %s450 = scalar_lea.vmem %s11, %s449
        %p451 = pneg %p283
        %p452 = pneg %p280
        %p453 = pneg %p309
        %p454 = pneg %p306
        %s455 = sand.u32 %s296, 1
        %s456 = scalar_lea.sflag [#allocation5], %s455
        %s457 = sand.u32 %s296, 1
        %s458 = smul.addr %s457, 32
        %s459 = scalar_lea.vmem [#allocation4], %s458
        %s460 = smul.u32 4, %s26
        %s461 = smul.u32 4, %s26
        %p462 = scmp.lt.s32.totalorder %s461, 15
        %s463 = scalar_select %p462, %s461, 15
        %s464 = scalar_lea.vmem %s11, %s463
        %s465 = smul.u32 4, %s26
        %s466 = smul.u32 4, %s26
        %p467 = scmp.eq.s32.totalorder %s26, 0
        // Predicated region
        $region92: #{prediction_mlp.1} parent=86 // pred_check
          %p468 = pneg %p467
        $region93: #{prediction_mlp.1} parent=86 // pred_check_branch
          %470 = sbr.rel (%p468) target = $region95
        $region94: #{prediction_mlp.1} parent=86 // pred_region
          %v471 = vld [vmem:[%s0] sm:$0xff]
          %v472 = vld [vmem:[%s1] sm:$0xff]
          %v473 = vld [vmem:[%s1 + $0x8] sm:$0xff]
          %v474 = vld [vmem:[%s1 + $0x10] sm:$0xff]
          %v475 = vld [vmem:[%s1 + $0x18] sm:$0xff]
          %v476 = vld [vmem:[%s1 + $0x20] sm:$0xff]
          %v477 = vld [vmem:[%s1 + $0x28] sm:$0xff]
          %v478 = vld [vmem:[%s1 + $0x30] sm:$0xff]
          %v479 = vld [vmem:[%s1 + $0x38] sm:$0xff]
          %vm480 = vcmask 261120
          %v482 = vsel %vm480, %v471, 0
          %484 = vmatprep.subr.mxu0 0.0
          %485 = vmatpush1.msra.mxu0 0.0
          %486 = vmatprep.subr.mxu0 0.0
          %487 = vmatpush1.msra.mxu0 0.0
          %488 = vmatprep.subr.mxu0 0.0
          %489 = vmatpush1.msra.mxu0 0.0
          %490 = vmatprep.subr.mxu0 0.0
          %491 = vmatpush1.msra.mxu0 0.0
          %492 = vmatprep.subr.mxu0 0.0
          %493 = vmatpush1.msra.mxu0 0.0
          %494 = vmatprep.subr.mxu0 0.0
          %495 = vmatpush1.msra.mxu0 0.0
          %496 = vmatprep.subr.mxu0 0.0
          %497 = vmatpush1.msra.mxu0 0.0
          %498 = vmatprep.subr.mxu0 0.0
          %499 = vmatpush1.msra.mxu0 0.0
          %500 = vmatprep.subr.mxu0 0.0
          %501 = vmatpush1.msra.mxu0 0.0
          %502 = vmatprep.subr.mxu0 0.0
          %503 = vmatpush1.msra.mxu0 0.0
          %504 = vmatprep.subr.mxu0 0.0
          %505 = vmatpush1.msra.mxu0 0.0
          %506 = vmatprep.subr.mxu0 0.0
          %507 = vmatpush1.msra.mxu0 0.0
          %508 = vmatprep.subr.mxu0 %v479
          %509 = vmatpush1.msra.mxu0 %v478
          %510 = vmatprep.subr.mxu0 %v477
          %511 = vmatpush1.msra.mxu0 %v476
          %512 = vmatprep.subr.mxu0 %v475
          %513 = vmatpush1.msra.mxu0 %v474
          %514 = vmatprep.subr.mxu0 %v473
          %515 = vmatpush1.msra.mxu0 %v472
          %516 = vmatprep.subr.mxu0 0.0
          %517 = vmatpush2.msra.mxu0 0.0
          %518 = vmatprep.subr.mxu0 0.0
          %519 = vmatpush2.msra.mxu0 0.0
          %520 = vmatprep.subr.mxu0 0.0
          %521 = vmatpush2.msra.mxu0 0.0
          %522 = vmatprep.subr.mxu0 0.0
          %523 = vmatpush2.msra.mxu0 0.0
          %524 = vmatprep.subr.mxu0 0.0
          %525 = vmatpush2.msra.mxu0 0.0
          %526 = vmatprep.subr.mxu0 0.0
          %527 = vmatpush2.msra.mxu0 0.0
          %528 = vmatprep.subr.mxu0 0.0
          %529 = vmatpush2.msra.mxu0 0.0
          %530 = vmatprep.subr.mxu0 0.0
          %531 = vmatpush2.msra.mxu0 0.0
          %532 = vmatprep.subr.mxu0 0.0
          %533 = vmatpush2.msra.mxu0 0.0
          %534 = vmatprep.subr.mxu0 0.0
          %535 = vmatpush2.msra.mxu0 0.0
          %536 = vmatprep.subr.mxu0 0.0
          %537 = vmatpush2.msra.mxu0 0.0
          %538 = vmatprep.subr.mxu0 0.0
          %539 = vmatpush2.msra.mxu0 0.0
          %540 = vmatprep.subr.mxu0 0.0
          %541 = vmatpush2.msra.mxu0 0.0
          %542 = vmatprep.subr.mxu0 0.0
          %543 = vmatpush2.msra.mxu0 0.0
          %544 = vmatprep.subr.mxu0 0.0
          %545 = vmatpush2.msra.mxu0 0.0
          %546 = vmatprep.subr.mxu0 0.0
          %547 = vmatpush2.msra.mxu0 0.0
          %548 = vmatprep.mubr.f32.mxu0 0.0
          %549 = vmatmul.mubr.f32.gmra.mxu0 %v482
          %v550 = vpop.f32.mrf.mxu0
          %v551 = vadd.f32 0.0, %v550
          %v552 = vpop.f32.mrf.mxu0
          %v553 = vadd.f32 0.0, %v552
          %554 = vdwg.mxu0
          %v555 = vld [vmem:[%s2] sm:$0x3]
          %v556 = vld [vmem:[%s3] sm:$0x3]
          %v557 = vrot.slane %v551, 4
          %v558 = vadd.f32 %v551, %v557
          %v559 = vrot.slane %v558, 2
          %v560 = vadd.f32 %v558, %v559
          %v561 = vrot.slane %v560, 1
          %v562 = vadd.f32 %v560, %v561
          %v563 = vrot.slane %v553, 4
          %v564 = vadd.f32 %v553, %v563
          %v565 = vrot.slane %v564, 2
          %v566 = vadd.f32 %v564, %v565
          %v567 = vrot.slane %v566, 1
          %v568 = vadd.f32 %v566, %v567
          %v569 = vmul.f32 %v562, 0.125
          %v570 = vmul.f32 %v568, 0.125
          %v571 = vmul.f32 %v551, %v551
          %v572 = vmul.f32 %v553, %v553
          %v573 = vrot.slane %v571, 4
          %v574 = vadd.f32 %v571, %v573
          %v575 = vrot.slane %v574, 2
          %v576 = vadd.f32 %v574, %v575
          %v577 = vrot.slane %v576, 1
          %v578 = vadd.f32 %v576, %v577
          %v579 = vrot.slane %v572, 4
          %v580 = vadd.f32 %v572, %v579
          %v581 = vrot.slane %v580, 2
          %v582 = vadd.f32 %v580, %v581
          %v583 = vrot.slane %v582, 1
          %v584 = vadd.f32 %v582, %v583
          %v585 = vmul.f32 %v578, 0.125
          %v586 = vmul.f32 %v584, 0.125
          %v587 = vmul.f32 %v569, %v569
          %v588 = vmul.f32 %v570, %v570
          %v589 = vsub.f32 %v585, %v587
          %v590 = vsub.f32 %v586, %v588
          %v591 = vmax.f32 %v589, 0.0
          %v592 = vmax.f32 %v590, 0.0
          %v593 = vadd.f32 %v591, 1e-05
          %v594 = vadd.f32 %v592, 1e-05
          %v595 = vrsqrt.pop %v593
          %v596 = vrsqrt.pop %v594
          %v598 = vlaneseq
          %v599 = vshrl.u32 %v598, 7
          %v600 = vsub.s32 0, %v599
          %v601 = vrot.slane %v555, %v600
          %v602 = vlaneseq
          %v603 = vshrl.u32 %v602, 7
          %v604 = vsub.s32 1, %v603
          %v605 = vrot.slane %v555, %v604
          %v608 = vmul.f32 %v595, %v601
          %v609 = vmul.f32 %v596, %v605
          %v610 = vmul.f32 %v569, %v608
          %v611 = vmul.f32 %v570, %v609
          %v614 = vcombine.low %v610, %v611
          %v616 = vunpack.c.l.s4 1966171168
          %v617 = vunpack.c.0.s8 %v616
          %v618 = vlaneseq
          %v619 = vshrl.u32 %v618, 7
          %v620 = vsub.s32 %v617, %v619
          %v621 = vrot.slane %v614, %v620
          %v623 = vunpack.c.l.s4 1966171168
          %v624 = vunpack.c.0.s8 %v623
          %v625 = vlaneseq
          %v626 = vshrl.u32 %v625, 7
          %v627 = vsub.s32 %v624, %v626
          %v628 = vrot.slane %v621, %v627
          %v630 = vsub.f32 %v556, %v628
          %v631 = vlaneseq
          %v632 = vshrl.u32 %v631, 7
          %v633 = vsub.s32 0, %v632
          %v634 = vrot.slane %v608, %v633
          %v635 = vlaneseq
          %v636 = vshrl.u32 %v635, 7
          %v637 = vsub.s32 0, %v636
          %v638 = vrot.slane %v609, %v637
          %v639 = vmul.f32 %v551, %v634
          %v640 = vmul.f32 %v553, %v638
          %v642 = vlaneseq
          %v643 = vshrl.u32 %v642, 7
          %v644 = vsub.s32 0, %v643
          %v645 = vrot.slane %v630, %v644
          %v646 = vlaneseq
          %v647 = vshrl.u32 %v646, 7
          %v648 = vsub.s32 1, %v647
          %v649 = vrot.slane %v630, %v648
          %v652 = vadd.f32 %v639, %v645
          %v653 = vadd.f32 %v640, %v649
          %v654 = vmax.f32 %v652, 0.0
          %v655 = vmax.f32 %v653, 0.0
          %v656 = vld [vmem:[%s4] sm:$0xff]
          %v657 = vld [vmem:[%s4 + $0x8] sm:$0xff]
          %v658 = vld [vmem:[%s4 + $0x10] sm:$0xff]
          %v659 = vld [vmem:[%s4 + $0x18] sm:$0xff]
          %v660 = vld [vmem:[%s4 + $0x20] sm:$0xff]
          %v661 = vld [vmem:[%s4 + $0x28] sm:$0xff]
          %v662 = vld [vmem:[%s4 + $0x30] sm:$0xff]
          %v663 = vld [vmem:[%s4 + $0x38] sm:$0xff]
          %v664 = vld [vmem:[%s4 + $0x40] sm:$0xff]
          %v665 = vld [vmem:[%s4 + $0x48] sm:$0xff]
          %v666 = vld [vmem:[%s4 + $0x50] sm:$0xff]
          %v667 = vld [vmem:[%s4 + $0x58] sm:$0xff]
          %v668 = vld [vmem:[%s4 + $0x60] sm:$0xff]
          %v669 = vld [vmem:[%s4 + $0x68] sm:$0xff]
          %v670 = vld [vmem:[%s4 + $0x70] sm:$0xff]
          %v671 = vld [vmem:[%s4 + $0x78] sm:$0xff]
          %v672 = vld [vmem:[%s4 + $0x80] sm:$0xff]
          %v673 = vld [vmem:[%s4 + $0x88] sm:$0xff]
          %v674 = vld [vmem:[%s4 + $0x90] sm:$0xff]
          %v675 = vld [vmem:[%s4 + $0x98] sm:$0xff]
          %v676 = vld [vmem:[%s4 + $0xa0] sm:$0xff]
          %v677 = vld [vmem:[%s4 + $0xa8] sm:$0xff]
          %v678 = vld [vmem:[%s4 + $0xb0] sm:$0xff]
          %v679 = vld [vmem:[%s4 + $0xb8] sm:$0xff]
          %v680 = vld [vmem:[%s4 + $0xc0] sm:$0xff]
          %v681 = vld [vmem:[%s4 + $0xc8] sm:$0xff]
          %v682 = vld [vmem:[%s4 + $0xd0] sm:$0xff]
          %v683 = vld [vmem:[%s4 + $0xd8] sm:$0xff]
          %v684 = vld [vmem:[%s4 + $0xe0] sm:$0xff]
          %v685 = vld [vmem:[%s4 + $0xe8] sm:$0xff]
          %v686 = vld [vmem:[%s4 + $0xf0] sm:$0xff]
          %v687 = vld [vmem:[%s4 + $0xf8] sm:$0xff]
          %688 = vmatprep.subr.mxu0 0.0
          %689 = vmatpush1.msra.mxu0 %v671
          %690 = vmatprep.subr.mxu0 0.0
          %691 = vmatpush1.msra.mxu0 %v670
          %692 = vmatprep.subr.mxu0 0.0
          %693 = vmatpush1.msra.mxu0 %v669
          %694 = vmatprep.subr.mxu0 0.0
          %695 = vmatpush1.msra.mxu0 %v668
          %696 = vmatprep.subr.mxu0 0.0
          %697 = vmatpush1.msra.mxu0 %v667
          %698 = vmatprep.subr.mxu0 0.0
          %699 = vmatpush1.msra.mxu0 %v666
          %700 = vmatprep.subr.mxu0 0.0
          %701 = vmatpush1.msra.mxu0 %v665
          %702 = vmatprep.subr.mxu0 0.0
          %703 = vmatpush1.msra.mxu0 %v664
          %704 = vmatprep.subr.mxu0 0.0
          %705 = vmatpush1.msra.mxu0 %v663
          %706 = vmatprep.subr.mxu0 0.0
          %707 = vmatpush1.msra.mxu0 %v662
          %708 = vmatprep.subr.mxu0 0.0
          %709 = vmatpush1.msra.mxu0 %v661
          %710 = vmatprep.subr.mxu0 0.0
          %711 = vmatpush1.msra.mxu0 %v660
          %712 = vmatprep.subr.mxu0 0.0
          %713 = vmatpush1.msra.mxu0 %v659
          %714 = vmatprep.subr.mxu0 0.0
          %715 = vmatpush1.msra.mxu0 %v658
          %716 = vmatprep.subr.mxu0 0.0
          %717 = vmatpush1.msra.mxu0 %v657
          %718 = vmatprep.subr.mxu0 0.0
          %719 = vmatpush1.msra.mxu0 %v656
          %720 = vmatprep.subr.mxu0 0.0
          %721 = vmatpush2.msra.mxu0 %v687
          %722 = vmatprep.subr.mxu0 0.0
          %723 = vmatpush2.msra.mxu0 %v686
          %724 = vmatprep.subr.mxu0 0.0
          %725 = vmatpush2.msra.mxu0 %v685
          %726 = vmatprep.subr.mxu0 0.0
          %727 = vmatpush2.msra.mxu0 %v684
          %728 = vmatprep.subr.mxu0 0.0
          %729 = vmatpush2.msra.mxu0 %v683
          %730 = vmatprep.subr.mxu0 0.0
          %731 = vmatpush2.msra.mxu0 %v682
          %732 = vmatprep.subr.mxu0 0.0
          %733 = vmatpush2.msra.mxu0 %v681
          %734 = vmatprep.subr.mxu0 0.0
          %735 = vmatpush2.msra.mxu0 %v680
          %736 = vmatprep.subr.mxu0 0.0
          %737 = vmatpush2.msra.mxu0 %v679
          %738 = vmatprep.subr.mxu0 0.0
          %739 = vmatpush2.msra.mxu0 %v678
          %740 = vmatprep.subr.mxu0 0.0
          %741 = vmatpush2.msra.mxu0 %v677
          %742 = vmatprep.subr.mxu0 0.0
          %743 = vmatpush2.msra.mxu0 %v676
          %744 = vmatprep.subr.mxu0 0.0
          %745 = vmatpush2.msra.mxu0 %v675
          %746 = vmatprep.subr.mxu0 0.0
          %747 = vmatpush2.msra.mxu0 %v674
          %748 = vmatprep.subr.mxu0 0.0
          %749 = vmatpush2.msra.mxu0 %v673
          %750 = vmatprep.subr.mxu0 0.0
          %751 = vmatpush2.msra.mxu0 %v672
          %752 = vmatprep.mubr.f32.mxu0 %v655
          %753 = vmatmul.mubr.f32.gmra.mxu0 %v654
          %v754 = vpop.f32.mrf.mxu0
          %v755 = vadd.f32 0.0, %v754
          %v756 = vpop.f32.mrf.mxu0
          %757 = vdwg.mxu0
          %v758 = vld [vmem:[%s5] sm:$0x1]
          %v759 = vld [vmem:[%s6] sm:$0x1]
          %vm760 = vcmask 523264
          %v761 = vsel %vm760, %v755, 0.0
          %v762 = vrot.slane %v761, 4
          %v763 = vadd.f32 %v761, %v762
          %v764 = vrot.slane %v763, 2
          %v765 = vadd.f32 %v763, %v764
          %v766 = vrot.slane %v765, 1
          %v767 = vadd.f32 %v765, %v766
          %v768 = vmul.f32 %v767, 0.125
          %v769 = vmul.f32 %v755, %v755
          %v770 = vsel %vm760, %v769, 0.0
          %v771 = vrot.slane %v770, 4
          %v772 = vadd.f32 %v770, %v771
          %v773 = vrot.slane %v772, 2
          %v774 = vadd.f32 %v772, %v773
          %v775 = vrot.slane %v774, 1
          %v776 = vadd.f32 %v774, %v775
          %v777 = vmul.f32 %v776, 0.125
          %v778 = vmul.f32 %v768, %v768
          %v779 = vsub.f32 %v777, %v778
          %v780 = vmax.f32 %v779, 0.0
          %v781 = vadd.f32 %v780, 1e-05
          %v782 = vrsqrt.pop %v781
          %v783 = vmul.f32 %v782, %v758
          %v784 = vmul.f32 %v768, %v783
          %v785 = vsub.f32 %v759, %v784
          %v786 = vlaneseq
          %v787 = vshrl.u32 %v786, 7
          %v788 = vsub.s32 0, %v787
          %v789 = vrot.slane %v783, %v788
          %v790 = vmul.f32 %v755, %v789
          %v792 = vlaneseq
          %v793 = vshrl.u32 %v792, 7
          %v794 = vsub.s32 0, %v793
          %v795 = vrot.slane %v785, %v794
          %v797 = vadd.f32 %v790, %v795
          %v798 = vmax.f32 %v797, 0.0
          %v799 = vld [vmem:[%s7] sm:$0xff]
          %v800 = vld [vmem:[%s7 + $0x8] sm:$0xff]
          %v801 = vld [vmem:[%s7 + $0x10] sm:$0xff]
          %v802 = vld [vmem:[%s7 + $0x18] sm:$0xff]
          %v803 = vld [vmem:[%s7 + $0x20] sm:$0xff]
          %v804 = vld [vmem:[%s7 + $0x28] sm:$0xff]
          %v805 = vld [vmem:[%s7 + $0x30] sm:$0xff]
          %v806 = vld [vmem:[%s7 + $0x38] sm:$0xff]
          %v808 = vsel %vm760, %v798, 0
          %810 = vmatprep.subr.mxu0 0.0
          %811 = vmatpush1.msra.mxu0 0.0
          %812 = vmatprep.subr.mxu0 0.0
          %813 = vmatpush1.msra.mxu0 0.0
          %814 = vmatprep.subr.mxu0 0.0
          %815 = vmatpush1.msra.mxu0 0.0
          %816 = vmatprep.subr.mxu0 0.0
          %817 = vmatpush1.msra.mxu0 0.0
          %818 = vmatprep.subr.mxu0 0.0
          %819 = vmatpush1.msra.mxu0 0.0
          %820 = vmatprep.subr.mxu0 0.0
          %821 = vmatpush1.msra.mxu0 0.0
          %822 = vmatprep.subr.mxu0 0.0
          %823 = vmatpush1.msra.mxu0 0.0
          %824 = vmatprep.subr.mxu0 0.0
          %825 = vmatpush1.msra.mxu0 0.0
          %826 = vmatprep.subr.mxu0 0.0
          %827 = vmatpush1.msra.mxu0 %v806
          %828 = vmatprep.subr.mxu0 0.0
          %829 = vmatpush1.msra.mxu0 %v805
          %830 = vmatprep.subr.mxu0 0.0
          %831 = vmatpush1.msra.mxu0 %v804
          %832 = vmatprep.subr.mxu0 0.0
          %833 = vmatpush1.msra.mxu0 %v803
          %834 = vmatprep.subr.mxu0 0.0
          %835 = vmatpush1.msra.mxu0 %v802
          %836 = vmatprep.subr.mxu0 0.0
          %837 = vmatpush1.msra.mxu0 %v801
          %838 = vmatprep.subr.mxu0 0.0
          %839 = vmatpush1.msra.mxu0 %v800
          %840 = vmatprep.subr.mxu0 0.0
          %841 = vmatpush1.msra.mxu0 %v799
          %842 = vmatprep.subr.mxu0 0.0
          %843 = vmatpush2.msra.mxu0 0.0
          %844 = vmatprep.subr.mxu0 0.0
          %845 = vmatpush2.msra.mxu0 0.0
          %846 = vmatprep.subr.mxu0 0.0
          %847 = vmatpush2.msra.mxu0 0.0
          %848 = vmatprep.subr.mxu0 0.0
          %849 = vmatpush2.msra.mxu0 0.0
          %850 = vmatprep.subr.mxu0 0.0
          %851 = vmatpush2.msra.mxu0 0.0
          %852 = vmatprep.subr.mxu0 0.0
          %853 = vmatpush2.msra.mxu0 0.0
          %854 = vmatprep.subr.mxu0 0.0
          %855 = vmatpush2.msra.mxu0 0.0
          %856 = vmatprep.subr.mxu0 0.0
          %857 = vmatpush2.msra.mxu0 0.0
          %858 = vmatprep.subr.mxu0 0.0
          %859 = vmatpush2.msra.mxu0 0.0
          %860 = vmatprep.subr.mxu0 0.0
          %861 = vmatpush2.msra.mxu0 0.0
          %862 = vmatprep.subr.mxu0 0.0
          %863 = vmatpush2.msra.mxu0 0.0
          %864 = vmatprep.subr.mxu0 0.0
          %865 = vmatpush2.msra.mxu0 0.0
          %866 = vmatprep.subr.mxu0 0.0
          %867 = vmatpush2.msra.mxu0 0.0
          %868 = vmatprep.subr.mxu0 0.0
          %869 = vmatpush2.msra.mxu0 0.0
          %870 = vmatprep.subr.mxu0 0.0
          %871 = vmatpush2.msra.mxu0 0.0
          %872 = vmatprep.subr.mxu0 0.0
          %873 = vmatpush2.msra.mxu0 0.0
          %874 = vmatprep.mubr.f32.mxu0 0.0
          %875 = vmatmul.mubr.f32.gmra.mxu0 %v808
          %v876 = vpop.f32.mrf.mxu0
          %v877 = vadd.f32 0.0, %v876
          %v878 = vpop.f32.mrf.mxu0
          %879 = vdwg.mxu0
          %v880 = vld [vmem:[%s8] sm:$0x1]
          %v881 = vld [vmem:[%s9] sm:$0x1]
          %vm882 = vcmask 130048
          %v883 = vsel %vm882, %v877, 0.0
          %v884 = vrot.slane %v883, 4
          %v885 = vadd.f32 %v883, %v884
          %v886 = vrot.slane %v885, 2
          %v887 = vadd.f32 %v885, %v886
          %v888 = vrot.slane %v887, 1
          %v889 = vadd.f32 %v887, %v888
          %v890 = vmul.f32 %v889, 0.125
          %v891 = vmul.f32 %v877, %v877
          %v892 = vsel %vm882, %v891, 0.0
          %v893 = vrot.slane %v892, 4
          %v894 = vadd.f32 %v892, %v893
          %v895 = vrot.slane %v894, 2
          %v896 = vadd.f32 %v894, %v895
          %v897 = vrot.slane %v896, 1
          %v898 = vadd.f32 %v896, %v897
          %v899 = vmul.f32 %v898, 0.125
          %v900 = vmul.f32 %v890, %v890
          %v901 = vsub.f32 %v899, %v900
          %v902 = vmax.f32 %v901, 0.0
          %v903 = vadd.f32 %v902, 1e-05
          %v904 = vrsqrt.pop %v903
          %v905 = vmul.f32 %v904, %v880
          %v906 = vmul.f32 %v890, %v905
          %v907 = vsub.f32 %v881, %v906
          %v908 = vlaneseq
          %v909 = vshrl.u32 %v908, 7
          %v910 = vsub.s32 0, %v909
          %v911 = vrot.slane %v905, %v910
          %v912 = vmul.f32 %v877, %v911
          %v914 = vlaneseq
          %v915 = vshrl.u32 %v914, 7
          %v916 = vsub.s32 0, %v915
          %v917 = vrot.slane %v907, %v916
          %v919 = vadd.f32 %v912, %v917
          %v920 = vmax.f32 %v919, 0.0
          %921 = vst.msk [vmem:[#allocation2] sm:$0xff] %vm882, %v920
        $region95: #{prediction_mlp.1} parent=86 // pred_fallthru
          _
        %v922 = vld [vmem:[#allocation2] sm:$0xff]
        %v923 = vld [vmem:[%s417] sm:$0xff]
        %v924 = vld [vmem:[%s417 + $0x8] sm:$0xff]
        %v925 = vld [vmem:[%s417 + $0x10] sm:$0xff]
        %v926 = vld [vmem:[%s417 + $0x18] sm:$0xff]
        %v927 = vld [vmem:[%s417 + $0x20] sm:$0xff]
        %v928 = vld [vmem:[%s417 + $0x28] sm:$0xff]
        %v929 = vld [vmem:[%s417 + $0x30] sm:$0xff]
        %v930 = vld [vmem:[%s417 + $0x38] sm:$0xff]
        %v931 = vld [vmem:[%s464] sm:$0xf]
        %v933 = vlaneseq
        %v934 = vshrl.u32 %v933, 7
        %v935 = vsub.s32 0, %v934
        %v936 = vrot.slane %v931, %v935
        %v937 = vlaneseq
        %v938 = vshrl.u32 %v937, 7
        %v939 = vsub.s32 1, %v938
        %v940 = vrot.slane %v931, %v939
        %v941 = vlaneseq
        %v942 = vshrl.u32 %v941, 7
        %v943 = vsub.s32 2, %v942
        %v944 = vrot.slane %v931, %v943
        %v945 = vlaneseq
        %v946 = vshrl.u32 %v945, 7
        %v947 = vsub.s32 3, %v946
        %v948 = vrot.slane %v931, %v947
        %vm953 = vcmask 130048
        %v955 = vsel %vm953, %v922, 0
        %957 = vmatprep.subr.mxu0 0.0
        %958 = vmatpush1.msra.mxu0 0.0
        %959 = vmatprep.subr.mxu0 0.0
        %960 = vmatpush1.msra.mxu0 0.0
        %961 = vmatprep.subr.mxu0 0.0
        %962 = vmatpush1.msra.mxu0 0.0
        %963 = vmatprep.subr.mxu0 0.0
        %964 = vmatpush1.msra.mxu0 0.0
        %965 = vmatprep.subr.mxu0 0.0
        %966 = vmatpush1.msra.mxu0 0.0
        %967 = vmatprep.subr.mxu0 0.0
        %968 = vmatpush1.msra.mxu0 0.0
        %969 = vmatprep.subr.mxu0 0.0
        %970 = vmatpush1.msra.mxu0 0.0
        %971 = vmatprep.subr.mxu0 0.0
        %972 = vmatpush1.msra.mxu0 0.0
        %973 = vmatprep.subr.mxu0 0.0
        %974 = vmatpush1.msra.mxu0 0.0
        %975 = vmatprep.subr.mxu0 0.0
        %976 = vmatpush1.msra.mxu0 0.0
        %977 = vmatprep.subr.mxu0 0.0
        %978 = vmatpush1.msra.mxu0 0.0
        %979 = vmatprep.subr.mxu0 0.0
        %980 = vmatpush1.msra.mxu0 0.0
        %981 = vmatprep.subr.mxu0 0.0
        %982 = vmatpush1.msra.mxu0 0.0
        %983 = vmatprep.subr.mxu0 0.0
        %984 = vmatpush1.msra.mxu0 0.0
        %985 = vmatprep.subr.mxu0 %v928
        %986 = vmatpush1.msra.mxu0 %v927
        %987 = vmatprep.subr.mxu0 %v924
        %988 = vmatpush1.msra.mxu0 %v923
        %989 = vmatprep.subr.mxu0 0.0
        %990 = vmatpush2.msra.mxu0 0.0
        %991 = vmatprep.subr.mxu0 0.0
        %992 = vmatpush2.msra.mxu0 0.0
        %993 = vmatprep.subr.mxu0 0.0
        %994 = vmatpush2.msra.mxu0 0.0
        %995 = vmatprep.subr.mxu0 0.0
        %996 = vmatpush2.msra.mxu0 0.0
        %997 = vmatprep.subr.mxu0 0.0
        %998 = vmatpush2.msra.mxu0 0.0
        %999 = vmatprep.subr.mxu0 0.0
        %1000 = vmatpush2.msra.mxu0 0.0
        %1001 = vmatprep.subr.mxu0 0.0
        %1002 = vmatpush2.msra.mxu0 0.0
        %1003 = vmatprep.subr.mxu0 0.0
        %1004 = vmatpush2.msra.mxu0 0.0
        %1005 = vmatprep.subr.mxu0 0.0
        %1006 = vmatpush2.msra.mxu0 0.0
        %1007 = vmatprep.subr.mxu0 0.0
        %1008 = vmatpush2.msra.mxu0 0.0
        %1009 = vmatprep.subr.mxu0 0.0
        %1010 = vmatpush2.msra.mxu0 0.0
        %1011 = vmatprep.subr.mxu0 0.0
        %1012 = vmatpush2.msra.mxu0 0.0
        %1013 = vmatprep.subr.mxu0 0.0
        %1014 = vmatpush2.msra.mxu0 0.0
        %1015 = vmatprep.subr.mxu0 0.0
        %1016 = vmatpush2.msra.mxu0 0.0
        %1017 = vmatprep.subr.mxu0 0.0
        %1018 = vmatpush2.msra.mxu0 0.0
        %1019 = vmatprep.subr.mxu0 0.0
        %1020 = vmatpush2.msra.mxu0 0.0
        %1021 = vmatprep.mubr.f32.mxu0 0.0
        %1022 = vmatmul.mubr.f32.gmra.mxu0 %v955
        %v1023 = vpop.f32.mrf.mxu0
        %v1024 = vadd.f32 %v936, %v1023
        %v1025 = vpop.f32.mrf.mxu0
        %v1026 = vadd.f32 %v940, %v1025
        %1027 = vdwg.mxu0
        %1028 = vmatprep.subr.mxu0 0.0
        %1029 = vmatpush1.msra.mxu0 0.0
        %1030 = vmatprep.subr.mxu0 0.0
        %1031 = vmatpush1.msra.mxu0 0.0
        %1032 = vmatprep.subr.mxu0 0.0
        %1033 = vmatpush1.msra.mxu0 0.0
        %1034 = vmatprep.subr.mxu0 0.0
        %1035 = vmatpush1.msra.mxu0 0.0
        %1036 = vmatprep.subr.mxu0 0.0
        %1037 = vmatpush1.msra.mxu0 0.0
        %1038 = vmatprep.subr.mxu0 0.0
        %1039 = vmatpush1.msra.mxu0 0.0
        %1040 = vmatprep.subr.mxu0 0.0
        %1041 = vmatpush1.msra.mxu0 0.0
        %1042 = vmatprep.subr.mxu0 0.0
        %1043 = vmatpush1.msra.mxu0 0.0
        %1044 = vmatprep.subr.mxu0 0.0
        %1045 = vmatpush1.msra.mxu0 0.0
        %1046 = vmatprep.subr.mxu0 0.0
        %1047 = vmatpush1.msra.mxu0 0.0
        %1048 = vmatprep.subr.mxu0 0.0
        %1049 = vmatpush1.msra.mxu0 0.0
        %1050 = vmatprep.subr.mxu0 0.0
        %1051 = vmatpush1.msra.mxu0 0.0
        %1052 = vmatprep.subr.mxu0 0.0
        %1053 = vmatpush1.msra.mxu0 0.0
        %1054 = vmatprep.subr.mxu0 0.0
        %1055 = vmatpush1.msra.mxu0 0.0
        %1056 = vmatprep.subr.mxu0 %v930
        %1057 = vmatpush1.msra.mxu0 %v929
        %1058 = vmatprep.subr.mxu0 %v926
        %1059 = vmatpush1.msra.mxu0 %v925
        %1060 = vmatprep.subr.mxu0 0.0
        %1061 = vmatpush2.msra.mxu0 0.0
        %1062 = vmatprep.subr.mxu0 0.0
        %1063 = vmatpush2.msra.mxu0 0.0
        %1064 = vmatprep.subr.mxu0 0.0
        %1065 = vmatpush2.msra.mxu0 0.0
        %1066 = vmatprep.subr.mxu0 0.0
        %1067 = vmatpush2.msra.mxu0 0.0
        %1068 = vmatprep.subr.mxu0 0.0
        %1069 = vmatpush2.msra.mxu0 0.0
        %1070 = vmatprep.subr.mxu0 0.0
        %1071 = vmatpush2.msra.mxu0 0.0
        %1072 = vmatprep.subr.mxu0 0.0
        %1073 = vmatpush2.msra.mxu0 0.0
        %1074 = vmatprep.subr.mxu0 0.0
        %1075 = vmatpush2.msra.mxu0 0.0
        %1076 = vmatprep.subr.mxu0 0.0
        %1077 = vmatpush2.msra.mxu0 0.0
        %1078 = vmatprep.subr.mxu0 0.0
        %1079 = vmatpush2.msra.mxu0 0.0
        %1080 = vmatprep.subr.mxu0 0.0
        %1081 = vmatpush2.msra.mxu0 0.0
        %1082 = vmatprep.subr.mxu0 0.0
        %1083 = vmatpush2.msra.mxu0 0.0
        %1084 = vmatprep.subr.mxu0 0.0
        %1085 = vmatpush2.msra.mxu0 0.0
        %1086 = vmatprep.subr.mxu0 0.0
        %1087 = vmatpush2.msra.mxu0 0.0
        %1088 = vmatprep.subr.mxu0 0.0
        %1089 = vmatpush2.msra.mxu0 0.0
        %1090 = vmatprep.subr.mxu0 0.0
        %1091 = vmatpush2.msra.mxu0 0.0
        %1092 = vmatprep.mubr.f32.mxu0 0.0
        %1093 = vmatmul.mubr.f32.gmra.mxu0 %v955
        %v1094 = vpop.f32.mrf.mxu0
        %v1095 = vadd.f32 %v944, %v1094
        %v1096 = vpop.f32.mrf.mxu0
        %v1097 = vadd.f32 %v948, %v1096
        %1098 = vdwg.mxu0
        %1099 = vst [vmem:[%s459] sm:$0xff] %v1024
        %1100 = vst [vmem:[%s459 + $0x8] sm:$0xff] %v1026
        %1101 = vst [vmem:[%s459 + $0x10] sm:$0xff] %v1095
        %1102 = vst [vmem:[%s459 + $0x18] sm:$0xff] %v1097
        %s1103 = sand.u32 %s296, 1
        %s1104 = scalar_lea.sflag [#allocation5], %s1103
        %s1105 = sand.u32 %s296, 1
        %s1106 = smul.addr %s1105, 32
        %s1107 = scalar_lea.vmem [#allocation4], %s1106
        // Predicated region
        $region96: #{prediction_mlp.1} parent=86 // pred_check
          %p1108 = pneg %p306
        $region97: #{prediction_mlp.1} parent=86 // pred_check_branch
          %1110 = sbr.rel (%p1108) target = $region99
        $region98: #{prediction_mlp.1} parent=86 // pred_region
          %s1111 = smul.u32 4, %s26
          %s1113 = ssub.s32 512, 512
          %1114 = vsyncadd %s1104, %s1113
          %s1115 = smul.addr %s1111, 128
          %s1116 = scalar_lea.hbm %s12, %s1115
          %s1118 = sshll.u32 %s1107, 4
          %s1119 = int_to_ptr.vmem [resolvable:$true] %s1118
          %1121 = dma.vmem_to_hbm [thread:$0]  %s1119, 512, %s1116, %s1104
        $region99: #{prediction_mlp.1} parent=86 // pred_fallthru
          _
      $region87: #{prediction_mlp.1} parent=5 // pred_fallthru
        _
      %p1122 = scmp.le.s32.totalorder 2, %s21
      // Predicated region
      $region100: #{prediction_mlp.1} parent=5 // pred_check
        %p1123 = pneg %p1122
      $region101: #{prediction_mlp.1} parent=5 // pred_check_branch
        %1125 = sbr.rel (%p1123) target = $region103
      $region102: #{prediction_mlp.1} parent=5 // pred_region
        %s1126 = ssub.s32 %s21, 2
        // Predicated region
        $region104: #{prediction_mlp.1} parent=102 // pred_check
          %p1127 = pneg %p312
        $region105: #{prediction_mlp.1} parent=102 // pred_check_branch
          %1129 = sbr.rel (%p1127) target = $region107
        $region106: #{prediction_mlp.1} parent=102 // pred_region
          %s1130 = sand.u32 %s297, 1
          %s1131 = scalar_lea.sflag [#allocation5], %s1130
          %s1132 = sand.u32 %s297, 1
          %s1133 = smul.addr %s1132, 32
          %s1134 = scalar_lea.vmem [#allocation4], %s1133
          %1135 = dma.done %s1131, 512
        $region107: #{prediction_mlp.1} parent=102 // pred_fallthru
          _
      $region103: #{prediction_mlp.1} parent=5 // pred_fallthru
        _
    $region6: #{prediction_mlp.1} parent=1 // loop_footer
      %s25 = sadd.s32 1, %s21
    $region7: #{prediction_mlp.1} parent=1 // loop_footer_branch
      %20 = sbr.rel target = $region3
    $region8: #{prediction_mlp.1} parent=1 // loop_exit
      _
    %1136 = vsyncpa [#allocation5], 1
    %s1137 = scalar_lea.sflag [#allocation5], 1
    %1138 = vsyncpa %s1137, 1

</llo_original>
